<compile_context>
chip_gen: v7x
topology: tpu7x:2x2x1
jax: 0.10.0
libtpu: 0.0.40
codegen_flags: <defaults>
</compile_context>

<pallas_src>
import functools

import jax
import jax.numpy as jnp
from jax.experimental import pallas as pl
from jax.experimental.pallas import tpu as pltpu


def _triplet_partial_kernel(a_ref, p_ref, n_ref, o_ref, *, margin, batch, tile):
    a = a_ref[...].astype(jnp.float32)
    p = p_ref[...].astype(jnp.float32)
    n = n_ref[...].astype(jnp.float32)

    # per-row squared Euclidean distances, reduced over the lane (feature) axis
    dp = jnp.sum((a - p) ** 2, axis=1, keepdims=True)    # (TB, 1)
    dna = jnp.sum((a - n) ** 2, axis=1, keepdims=True)   # (TB, 1)
    dnb = jnp.sum((p - n) ** 2, axis=1, keepdims=True)   # (TB, 1)

    losses = jnp.maximum(dp - (dna + dnb) * 0.5 + margin, 0.0)  # (TB, 1)

    # zero out rows of the (possibly ragged / OOB-padded) last batch tile
    row = tile * pl.program_id(0) + jax.lax.broadcasted_iota(
        jnp.int32, losses.shape, 0)
    losses = jnp.where(row < batch, losses, 0.0)

    # lane-dense (1, 128) partial-sum row for this tile (lane 0 is read back)
    o_ref[...] = jnp.broadcast_to(jnp.sum(losses), o_ref.shape)


def _choose_batch_tile(batch, feat, itemsize):
    """Largest batch tile such that 3 inputs x 2 pipeline buffers fit a ~16 MiB
    VMEM budget (safe on v7x's 64 MiB VMEM under a 32 MiB scoped limit)."""
    budget_bytes = 16 * 1024 * 1024
    cap = budget_bytes // (3 * 2 * feat * itemsize)
    cap = max(32, (cap // 32) * 32)   # multiple of 32: legal sublane count for
                                      # f32 / bf16 / int8 block shapes
    cap = min(cap, 2048)
    if batch <= cap:
        return batch                  # single tile == full dim (always legal)
    return cap


def triplet_loss(anchor, positive, negative, margin=1.0, tile=None):
    """Pallas TPU implementation of TripletLoss.forward.

    anchor/positive/negative: (B, D) arrays (f32 or bf16). Returns f32 scalar.
    """
    assert anchor.shape == positive.shape == negative.shape
    B, D = anchor.shape

    if tile is None:
        tile = _choose_batch_tile(B, D, jnp.dtype(anchor.dtype).itemsize)
    num_tiles = pl.cdiv(B, tile)

    kernel = functools.partial(
        _triplet_partial_kernel, margin=float(margin), batch=B, tile=tile)

    in_spec = pl.BlockSpec((tile, D), lambda i: (i, 0))
    partials = pl.pallas_call(
        kernel,
        out_shape=jax.ShapeDtypeStruct((num_tiles, 128), jnp.float32),
        grid=(num_tiles,),
        in_specs=[in_spec, in_spec, in_spec],
        out_specs=pl.BlockSpec((1, 128), lambda i: (i, 0)),
        compiler_params=pltpu.CompilerParams(
            dimension_semantics=("parallel",),
            vmem_limit_bytes=32 * 1024 * 1024,
        ),
    )(anchor, positive, negative)

    # tiny final reduction + mean (divide by the true batch size) in plain JAX
    return jnp.sum(partials[:, 0]) / B


def _ref_loss(a, p, n, margin):
    a, p, n = (x.astype(jnp.float32) for x in (a, p, n))
    dp = jnp.sum((a - p) ** 2, axis=1)
    dna = jnp.sum((a - n) ** 2, axis=1)
    dnb = jnp.sum((p - n) ** 2, axis=1)
    return jnp.mean(jnp.maximum(dp - (dna + dnb) / 2.0 + margin, 0.0))


if __name__ == "__main__":
    keys = jax.random.split(jax.random.PRNGKey(0), 6)

    # --- test 1: small embedding batch (single tile path) ------------------
    B, D = 8, 32
    anchor = jax.random.normal(keys[0], (B, D), dtype=jnp.float32)
    positive = jax.random.normal(keys[1], (B, D), dtype=jnp.float32)
    negative = jax.random.normal(keys[2], (B, D), dtype=jnp.float32)

    loss = triplet_loss(anchor, positive, negative, margin=1.0)
    jax.block_until_ready(loss)
    ref = _ref_loss(anchor, positive, negative, 1.0)
    assert jnp.allclose(loss, ref, atol=1e-5, rtol=1e-5), (loss, ref)

    # --- test 2: ragged multi-tile path (forced small tile, B % tile != 0) --
    B2, D2 = 100, 256
    a2 = jax.random.normal(keys[3], (B2, D2), dtype=jnp.float32)
    p2 = jax.random.normal(keys[4], (B2, D2), dtype=jnp.float32)
    n2 = jax.random.normal(keys[5], (B2, D2), dtype=jnp.float32)

    loss2 = triplet_loss(a2, p2, n2, margin=1.0, tile=32)
    jax.block_until_ready(loss2)
    ref2 = _ref_loss(a2, p2, n2, 1.0)
    assert jnp.allclose(loss2, ref2, atol=1e-4, rtol=1e-5), (loss2, ref2)

    print("KERNEL_OK")
</pallas_src>

<mosaic_0001>
module attributes {stable_mosaic.version = 11 : i64} {
  func.func @_triplet_partial_kernel(%arg0: i32, %arg1: memref<8x32xf32, #tpu.memory_space<vmem>>, %arg2: memref<8x32xf32, #tpu.memory_space<vmem>>, %arg3: memref<8x32xf32, #tpu.memory_space<vmem>>, %arg4: memref<1x128xf32, #tpu.memory_space<vmem>>) attributes {dimension_semantics = [#tpu.dimension_semantics<parallel>], iteration_bounds = array<i64: 1>, scalar_prefetch = 0 : i64, scratch_operands = 0 : i64, tpu.core_type = #tpu.core_type<tc>, window_params = [{transform_indices = @transform_0, window_bounds = array<i64: 8, 32>}, {transform_indices = @transform_1, window_bounds = array<i64: 8, 32>}, {transform_indices = @transform_2, window_bounds = array<i64: 8, 32>}, {transform_indices = @transform_3, window_bounds = array<i64: 1, 128>}]} {
    %c0 = arith.constant 0 : index
    %c0_0 = arith.constant 0 : index
    %0 = vector.load %arg1[%c0, %c0_0] : memref<8x32xf32, #tpu.memory_space<vmem>>, vector<8x32xf32>
    %c0_1 = arith.constant 0 : index
    %c0_2 = arith.constant 0 : index
    %1 = vector.load %arg2[%c0_1, %c0_2] : memref<8x32xf32, #tpu.memory_space<vmem>>, vector<8x32xf32>
    %c0_3 = arith.constant 0 : index
    %c0_4 = arith.constant 0 : index
    %2 = vector.load %arg3[%c0_3, %c0_4] : memref<8x32xf32, #tpu.memory_space<vmem>>, vector<8x32xf32>
    %3 = arith.subf %0, %1 : vector<8x32xf32>
    %4 = arith.mulf %3, %3 : vector<8x32xf32>
    %cst = arith.constant dense<0.000000e+00> : vector<8xf32>
    %5 = vector.multi_reduction <add>, %4, %cst [1] : vector<8x32xf32> to vector<8xf32>
    %6 = vector.shape_cast %5 : vector<8xf32> to vector<8x1xf32>
    %7 = arith.subf %0, %2 : vector<8x32xf32>
    %8 = arith.mulf %7, %7 : vector<8x32xf32>
    %cst_5 = arith.constant dense<0.000000e+00> : vector<8xf32>
    %9 = vector.multi_reduction <add>, %8, %cst_5 [1] : vector<8x32xf32> to vector<8xf32>
    %10 = vector.shape_cast %9 : vector<8xf32> to vector<8x1xf32>
    %11 = arith.subf %1, %2 : vector<8x32xf32>
    %12 = arith.mulf %11, %11 : vector<8x32xf32>
    %cst_6 = arith.constant dense<0.000000e+00> : vector<8xf32>
    %13 = vector.multi_reduction <add>, %12, %cst_6 [1] : vector<8x32xf32> to vector<8xf32>
    %14 = vector.shape_cast %13 : vector<8xf32> to vector<8x1xf32>
    %15 = arith.addf %10, %14 : vector<8x1xf32>
    %cst_7 = arith.constant 5.000000e-01 : f32
    %16 = vector.broadcast %cst_7 : f32 to vector<8x1xf32>
    %17 = arith.mulf %15, %16 : vector<8x1xf32>
    %18 = arith.subf %6, %17 : vector<8x1xf32>
    %cst_8 = arith.constant 1.000000e+00 : f32
    %19 = vector.broadcast %cst_8 : f32 to vector<8x1xf32>
    %20 = arith.addf %18, %19 : vector<8x1xf32>
    %cst_9 = arith.constant 0.000000e+00 : f32
    %21 = vector.broadcast %cst_9 : f32 to vector<8x1xf32>
    %22 = arith.maximumf %20, %21 : vector<8x1xf32>
    %c8_i32 = arith.constant 8 : i32
    %23 = arith.muli %c8_i32, %arg0 : i32
    %24 = tpu.iota {dimensions = array<i32: 0>} : vector<8x1xi32>
    %25 = vector.broadcast %23 : i32 to vector<8x1xi32>
    %26 = arith.addi %25, %24 : vector<8x1xi32>
    %c8_i32_10 = arith.constant 8 : i32
    %27 = vector.broadcast %c8_i32_10 : i32 to vector<8x1xi32>
    %28 = arith.cmpi slt, %26, %27 : vector<8x1xi32>
    %cst_11 = arith.constant 0.000000e+00 : f32
    %29 = vector.broadcast %cst_11 : f32 to vector<8x1xf32>
    %30 = arith.select %28, %22, %29 : vector<8x1xi1>, vector<8x1xf32>
    %31 = vector.shape_cast %30 : vector<8x1xf32> to vector<1x8x1xf32>
    %cst_12 = arith.constant dense<0.000000e+00> : vector<1xf32>
    %32 = vector.multi_reduction <add>, %31, %cst_12 [1, 2] : vector<1x8x1xf32> to vector<1xf32>
    %33 = vector.shape_cast %32 : vector<1xf32> to vector<1x1x1xf32>
    %34 = vector.extract %33[0, 0, 0] : f32 from vector<1x1x1xf32>
    %35 = vector.broadcast %34 : f32 to vector<1x128xf32>
    %c0_13 = arith.constant 0 : index
    %c0_14 = arith.constant 0 : index
    %36 = vector.load %arg4[%c0_13, %c0_14] : memref<1x128xf32, #tpu.memory_space<vmem>>, vector<1x128xf32>
    tpu.vector_store %arg4[%c0_13, %c0_14], %35 {strides = array<i32>} : memref<1x128xf32, #tpu.memory_space<vmem>>, vector<1x128xf32>,
    return
  }
  func.func @transform_0(%arg0: i32) -> (i32, i32) {
    %c0_i32 = arith.constant 0 : i32
    %c0_i32_0 = arith.constant 0 : i32
    return %arg0, %c0_i32 : i32, i32
  }
  func.func @transform_1(%arg0: i32) -> (i32, i32) {
    %c0_i32 = arith.constant 0 : i32
    %c0_i32_0 = arith.constant 0 : i32
    return %arg0, %c0_i32 : i32, i32
  }
  func.func @transform_2(%arg0: i32) -> (i32, i32) {
    %c0_i32 = arith.constant 0 : i32
    %c0_i32_0 = arith.constant 0 : i32
    return %arg0, %c0_i32 : i32, i32
  }
  func.func @transform_3(%arg0: i32) -> (i32, i32) {
    %c0_i32 = arith.constant 0 : i32
    %c0_i32_0 = arith.constant 0 : i32
    return %arg0, %c0_i32 : i32, i32
  }
}

</mosaic_0001>

<llo_original>
// kernel: tpu_custom_call.1
$region0: #{tpu_custom_call.1}
  #allocation0 [shape = 'u32[]', space=smem, size = 0x4, offset = 0x4, fixed_abs, tag = 'smem constant byte address 0x4 - core index']
  #allocation1 [shape = 'u32[144,128]{1,0:T(1,128)}', space=vmem, size = 0x12000, scoped, tag = 'internal scratch']
  %s0 = inlined_call_operand.hbm [shape: f32[8,32], index: 0, kind: input, shape index: {}]
  %s1 = inlined_call_operand.hbm [shape: f32[8,32], index: 1, kind: input, shape index: {}]
  %s2 = inlined_call_operand.hbm [shape: f32[8,32], index: 2, kind: input, shape index: {}]
  %s3 = inlined_call_operand.hbm [shape: f32[1,128], index: 3, kind: output, shape index: {}]
  %s4 = sld [smem:[#allocation0]]
  $region34: #{tpu_custom_call.1} parent=0
    _
  %s6 = ssub.s32 1, %s4
  %s7 = scalar_select 0, %s6, %s4
  $region1: #{tpu_custom_call.1} parent=0
    #allocation2 [shape = 'u8[4096]{0}', space=vmem, size = 0x1000, scoped, tag = 'input window, operand 0, single buffered']
    #allocation3 [shape = 's32[1]{0}', space=sflag, size = 0x4, scoped, tag = 'scoped memory for tpu_custom_call.1']
    #allocation4 [shape = 's32[1]{0}', space=sflag, size = 0x4, scoped, tag = 'scoped memory for tpu_custom_call.1']
    #allocation5 [shape = 'u8[4096]{0}', space=vmem, size = 0x1000, scoped, tag = 'input window, operand 1, single buffered']
    #allocation6 [shape = 's32[1]{0}', space=sflag, size = 0x4, scoped, tag = 'scoped memory for tpu_custom_call.1']
    #allocation7 [shape = 'u8[4096]{0}', space=vmem, size = 0x1000, scoped, tag = 'input window, operand 2, single buffered']
    #allocation8 [shape = 'u8[512]{0}', space=vmem, size = 0x400, scoped, tag = 'output window, operand 0, single buffered']
    %8 = vsyncpa [#allocation3], 0
    %9 = vsyncpa [#allocation6], 0
    %10 = vsyncpa [#allocation4], 0
    // Predicated region
    $region2: #{tpu_custom_call.1} parent=1 // pred_check
      _
    $region3: #{tpu_custom_call.1} parent=1 // pred_check_branch
      %12 = sbr.rel (0) target = $region5
    $region4: #{tpu_custom_call.1} parent=1 // pred_region
      %s14 = ssub.s32 128, 128
      %15 = vsyncadd [#allocation3], %s14
      %s17 = sshll.u32 [#allocation2], 4
      %s18 = int_to_ptr.vmem [resolvable:$true] %s17
      %20 = dma.hbm_to_vmem [thread:$0]  %s0, 128, %s18, [#allocation3]
    $region5: #{tpu_custom_call.1} parent=1 // pred_fallthru
      _
    // Predicated region
    $region6: #{tpu_custom_call.1} parent=1 // pred_check
      _
    $region7: #{tpu_custom_call.1} parent=1 // pred_check_branch
      %22 = sbr.rel (0) target = $region9
    $region8: #{tpu_custom_call.1} parent=1 // pred_region
      %s24 = ssub.s32 128, 128
      %25 = vsyncadd [#allocation6], %s24
      %s27 = sshll.u32 [#allocation5], 4
      %s28 = int_to_ptr.vmem [resolvable:$true] %s27
      %30 = dma.hbm_to_vmem [thread:$0]  %s1, 128, %s28, [#allocation6]
    $region9: #{tpu_custom_call.1} parent=1 // pred_fallthru
      _
    // Predicated region
    $region10: #{tpu_custom_call.1} parent=1 // pred_check
      _
    $region11: #{tpu_custom_call.1} parent=1 // pred_check_branch
      %32 = sbr.rel (0) target = $region13
    $region12: #{tpu_custom_call.1} parent=1 // pred_region
      %s34 = ssub.s32 128, 128
      %35 = vsyncadd [#allocation6], %s34
      %s37 = sshll.u32 [#allocation7], 4
      %s38 = int_to_ptr.vmem [resolvable:$true] %s37
      %40 = dma.hbm_to_vmem [thread:$0]  %s2, 128, %s38, [#allocation6]
    $region13: #{tpu_custom_call.1} parent=1 // pred_fallthru
      _
    // Predicated region
    $region14: #{tpu_custom_call.1} parent=1 // pred_check
      _
    $region15: #{tpu_custom_call.1} parent=1 // pred_check_branch
      %42 = sbr.rel (0) target = $region17
    $region16: #{tpu_custom_call.1} parent=1 // pred_region
      %43 = dma.done [#allocation3], 128
    $region17: #{tpu_custom_call.1} parent=1 // pred_fallthru
      _
    // Predicated region
    $region18: #{tpu_custom_call.1} parent=1 // pred_check
      _
    $region19: #{tpu_custom_call.1} parent=1 // pred_check_branch
      %45 = sbr.rel (0) target = $region21
    $region20: #{tpu_custom_call.1} parent=1 // pred_region
      %46 = dma.done [#allocation6], 128
    $region21: #{tpu_custom_call.1} parent=1 // pred_fallthru
      _
    // Predicated region
    $region22: #{tpu_custom_call.1} parent=1 // pred_check
      _
    $region23: #{tpu_custom_call.1} parent=1 // pred_check_branch
      %48 = sbr.rel (0) target = $region25
    $region24: #{tpu_custom_call.1} parent=1 // pred_region
      %49 = dma.done [#allocation6], 128
    $region25: #{tpu_custom_call.1} parent=1 // pred_fallthru
      _
    %v50 = vld [vmem:[#allocation2] sm:$0xff]
    %v51 = vld [vmem:[#allocation5] sm:$0xff]
    %v52 = vld [vmem:[#allocation7] sm:$0xff]
    %v53 = vsub.f32 %v50, %v51
    %v54 = vmul.f32 %v53, %v53
    %vm55 = vcmask 261120
    %v56 = vsel %vm55, %v54, 0.0
    %57 = vadd.xlane.f32.xlu0 %v56
    %v58 = vpop.xlane.xlu0 %57
    %v59 = vsub.f32 %v50, %v52
    %v60 = vmul.f32 %v59, %v59
    %v61 = vsel %vm55, %v60, 0.0
    %62 = vadd.xlane.f32.xlu0 %v61
    %v63 = vpop.xlane.xlu0 %62
    %v64 = vsub.f32 %v51, %v52
    %v65 = vmul.f32 %v64, %v64
    %v66 = vsel %vm55, %v65, 0.0
    %67 = vadd.xlane.f32.xlu0 %v66
    %v68 = vpop.xlane.xlu0 %67
    %v69 = vadd.f32 %v63, %v68
    %v70 = vmul.f32 %v69, 0.5
    %v71 = vsub.f32 %v58, %v70
    %v72 = vadd.f32 %v71, 1.0
    %v73 = vmax.f32 %v72, 0.0
    %s74 = smul.u32 0, 8
    %v75 = vlaneseq
    %v76 = vshrl.u32 %v75, 7
    %v77 = vstv %s74
    %v78 = vadd.s32 %v77, %v76
    %vm79 = vcmp.lt.s32.totalorder %v78, 8
    %v80 = vsel %vm79, %v73, 0.0
    %vm81 = vcmask 7168
    %v82 = vsel %vm81, %v80, 0.0
    %83 = vadd.xlane.f32.xlu0 %v82
    %v84 = vpop.xlane.xlu0 %83
    %v85 = vrot.slane %v84, 4
    %v86 = vadd.f32 %v84, %v85
    %v87 = vrot.slane %v86, 2
    %v88 = vadd.f32 %v86, %v87
    %v89 = vrot.slane %v88, 1
    %v90 = vadd.f32 %v88, %v89
    %s91 = vtos %v90
    %v92 = vstv %s91
    %93 = vst [vmem:[#allocation8] sm:$0x1] %v92
    // Predicated region
    $region26: #{tpu_custom_call.1} parent=1 // pred_check
      _
    $region27: #{tpu_custom_call.1} parent=1 // pred_check_branch
      %95 = sbr.rel (0) target = $region29
    $region28: #{tpu_custom_call.1} parent=1 // pred_region
      %s97 = ssub.s32 16, 16
      %98 = vsyncadd [#allocation4], %s97
      %s100 = sshll.u32 [#allocation8], 4
      %s101 = int_to_ptr.vmem [resolvable:$true] %s100
      %103 = dma.vmem_to_hbm [thread:$0]  %s101, 16, %s3, [#allocation4]
    $region29: #{tpu_custom_call.1} parent=1 // pred_fallthru
      _
    // Predicated region
    $region30: #{tpu_custom_call.1} parent=1 // pred_check
      _
    $region31: #{tpu_custom_call.1} parent=1 // pred_check_branch
      %105 = sbr.rel (0) target = $region33
    $region32: #{tpu_custom_call.1} parent=1 // pred_region
      %106 = dma.done [#allocation4], 16
    $region33: #{tpu_custom_call.1} parent=1 // pred_fallthru
      _
    %107 = vsyncpa [#allocation3], 1
    %108 = vsyncpa [#allocation6], 1
    %109 = vsyncpa [#allocation4], 1

</llo_original>
